<compile_context>
chip_gen: v5e
topology: v5e:2x2
jax: 0.10.0
libtpu: 0.0.40
codegen_flags: <defaults>
</compile_context>

<pallas_src>
import math

import jax
import jax.numpy as jnp
from jax.experimental import pallas as pl
from jax.experimental.pallas import tpu as pltpu


def _add_pe_kernel(x_ref, pe_ref, o_ref):
    # x_ref / o_ref : (TB, TC) tile of the flattened [B, L*D] activations.
    # pe_ref        : (1,  TC) matching tile of the flattened positional table;
    #                 broadcasts over the sublane (batch-row) axis.
    o_ref[...] = x_ref[...] + pe_ref[...]


def make_sinusoidal_pe(max_len: int, d_model: int, scale_factor: float = 1.0,
                       dtype=jnp.float32) -> jnp.ndarray:
    """Builds the (max_len, d_model) sinusoidal table (plain-JAX glue, d_model even)."""
    position = jnp.arange(0, max_len, dtype=jnp.float32)[:, None]            # (L, 1)
    div_term = jnp.exp(jnp.arange(0, d_model, 2, dtype=jnp.float32)
                       * (-math.log(10000.0) / d_model))                     # (D/2,)
    angles = position * div_term                                             # (L, D/2)
    pe = jnp.zeros((max_len, d_model), dtype=jnp.float32)
    pe = pe.at[:, 0::2].set(jnp.sin(angles))
    pe = pe.at[:, 1::2].set(jnp.cos(angles))
    return (scale_factor * pe).astype(dtype)


def _choose_tiles(batch: int, n_cols: int, itemsize: int,
                  budget_bytes: int = 8 * 1024 * 1024):
    """Pick (row_tile, col_tile) for the flattened [B, L*D] add.

    Row tile: full batch when small, else 256 (multiple of 8/16/32 -> packs for
    f32/bf16/int8).  Col tile: multiple of 128 lanes, sized so double-buffered
    x + out + pe blocks fit inside `budget_bytes` (conservative for v5e/v6e/v7x
    scoped VMEM defaults).
    """
    tb = batch if batch <= 256 else 256
    if n_cols <= 128:
        tc = n_cols                               # full (sub-128) last dim
    else:
        # 2 buffers * (x block + out block + pe block) <= budget
        max_tc = budget_bytes // (2 * (2 * tb + 1) * itemsize)
        tc = (min(max_tc, n_cols) // 128) * 128
        tc = max(tc, 128)
    return tb, tc


def absolute_positional_encoding(x: jnp.ndarray, pe: jnp.ndarray) -> jnp.ndarray:
    """x: [B, L, D], pe: [max_len, D] with max_len >= L  ->  x + pe[:L] (eval-mode dropout)."""
    B, L, D = x.shape
    max_len, d_model = pe.shape
    assert d_model == D, f"pe d_model {d_model} != x d_model {D}"
    assert max_len >= L, f"max_len {max_len} < seq_len {L}"

    pe = pe[:L].astype(x.dtype)                   # slice + cast outside the kernel

    n = L * D
    x2 = x.reshape(B, n)                          # lane-dense flattened layout
    pe2 = pe.reshape(1, n)

    tb, tc = _choose_tiles(B, n, jnp.dtype(x.dtype).itemsize)
    # Batch/row axis innermost -> pe column tile keeps a constant block index
    # across consecutive grid steps (fetched once per column tile).
    grid = (pl.cdiv(n, tc), pl.cdiv(B, tb))

    out2 = pl.pallas_call(
        _add_pe_kernel,
        out_shape=jax.ShapeDtypeStruct((B, n), x.dtype),
        grid_spec=pltpu.PrefetchScalarGridSpec(
            num_scalar_prefetch=0,
            grid=grid,
            in_specs=[
                pl.BlockSpec((tb, tc), lambda c, r: (r, c)),   # x tile
                pl.BlockSpec((1, tc), lambda c, r: (0, c)),    # shared pe tile
            ],
            out_specs=pl.BlockSpec((tb, tc), lambda c, r: (r, c)),
        ),
        compiler_params=pltpu.CompilerParams(
            dimension_semantics=("parallel", "parallel"),
            vmem_limit_bytes=32 * 1024 * 1024,
        ),
    )(x2, pe2)

    return out2.reshape(B, L, D)


if __name__ == "__main__":
    # Small shapes consistent with the module's forward:
    # batch=2, seq_len (== max_len) = 16, d_model = 32
    B, L, D = 2, 16, 32
    max_len = 16
    scale_factor = 1.0

    key = jax.random.PRNGKey(0)
    x = jax.random.normal(key, (B, L, D), dtype=jnp.float32)

    pe = make_sinusoidal_pe(max_len=max_len, d_model=D, scale_factor=scale_factor)

    out = jax.block_until_ready(absolute_positional_encoding(x, pe))

    # Reference check in plain JAX (eval-mode dropout == identity)
    ref = x + pe[None, :L, :]
    assert out.shape == (B, L, D)
    assert jnp.allclose(out, ref, atol=1e-6), "mismatch vs reference"

    print("KERNEL_OK")
</pallas_src>

<mosaic_0001>
module attributes {stable_mosaic.version = 11 : i64} {
  func.func @_add_pe_kernel(%arg0: i32, %arg1: i32, %arg2: memref<2x512xf32, #tpu.memory_space<vmem>>, %arg3: memref<1x512xf32, #tpu.memory_space<vmem>>, %arg4: memref<2x512xf32, #tpu.memory_space<vmem>>) attributes {dimension_semantics = [#tpu.dimension_semantics<parallel>, #tpu.dimension_semantics<parallel>], iteration_bounds = array<i64: 1, 1>, scalar_prefetch = 0 : i64, scratch_operands = 0 : i64, tpu.core_type = #tpu.core_type<tc>, window_params = [{transform_indices = @transform_0, window_bounds = array<i64: 2, 512>}, {transform_indices = @transform_1, window_bounds = array<i64: 1, 512>}, {transform_indices = @transform_2, window_bounds = array<i64: 2, 512>}]} {
    %c0 = arith.constant 0 : index
    %c0_0 = arith.constant 0 : index
    %0 = vector.load %arg2[%c0, %c0_0] : memref<2x512xf32, #tpu.memory_space<vmem>>, vector<2x512xf32>
    %c0_1 = arith.constant 0 : index
    %c0_2 = arith.constant 0 : index
    %1 = vector.load %arg3[%c0_1, %c0_2] : memref<1x512xf32, #tpu.memory_space<vmem>>, vector<1x512xf32>
    %2 = vector.broadcast %1 : vector<1x512xf32> to vector<2x512xf32>
    %3 = arith.addf %0, %2 : vector<2x512xf32>
    %c0_3 = arith.constant 0 : index
    %c0_4 = arith.constant 0 : index
    %4 = vector.load %arg4[%c0_3, %c0_4] : memref<2x512xf32, #tpu.memory_space<vmem>>, vector<2x512xf32>
    tpu.vector_store %arg4[%c0_3, %c0_4], %3 {strides = array<i32>} : memref<2x512xf32, #tpu.memory_space<vmem>>, vector<2x512xf32>,
    return
  }
  func.func @transform_0(%arg0: i32, %arg1: i32) -> (i32, i32) {
    %c0_i32 = arith.constant 0 : i32
    return %arg1, %arg0 : i32, i32
  }
  func.func @transform_1(%arg0: i32, %arg1: i32) -> (i32, i32) {
    %c0_i32 = arith.constant 0 : i32
    %c0_i32_0 = arith.constant 0 : i32
    return %c0_i32, %arg0 : i32, i32
  }
  func.func @transform_2(%arg0: i32, %arg1: i32) -> (i32, i32) {
    %c0_i32 = arith.constant 0 : i32
    return %arg1, %arg0 : i32, i32
  }
}

</mosaic_0001>

<llo_original>
// kernel: tpu_custom_call.1
$region0: #{tpu_custom_call.1}
  #allocation0 [shape = 'u32[]', space=smem, size = 0x4, offset = 0x4, fixed_abs, tag = 'smem constant byte address 0x4 - core index']
  #allocation1 [shape = 'u32[72,128]{1,0:T(1,128)}', space=vmem, size = 0x9000, scoped, tag = 'internal scratch']
  %s0 = inlined_call_operand.hbm [shape: f32[2,512], index: 0, kind: input, shape index: {}]
  %s1 = inlined_call_operand.hbm [shape: f32[1,512], index: 1, kind: input, shape index: {}]
  %s2 = inlined_call_operand.hbm [shape: f32[2,512], index: 2, kind: output, shape index: {}]
  %s3 = sld [smem:[#allocation0]]
  $region26: #{tpu_custom_call.1} parent=0
    _
  %s5 = ssub.s32 1, %s3
  %s6 = scalar_select 0, %s5, %s3
  $region1: #{tpu_custom_call.1} parent=0
    #allocation2 [shape = 'u8[4096]{0}', space=vmem, size = 0x1000, scoped, tag = 'input window, operand 0, single buffered']
    #allocation3 [shape = 's32[1]{0}', space=sflag, size = 0x4, scoped, tag = 'scoped memory for tpu_custom_call.1']
    #allocation4 [shape = 's32[1]{0}', space=sflag, size = 0x4, scoped, tag = 'scoped memory for tpu_custom_call.1']
    #allocation5 [shape = 'u8[2048]{0}', space=vmem, size = 0x800, scoped, tag = 'input window, operand 1, single buffered']
    #allocation6 [shape = 's32[1]{0}', space=sflag, size = 0x4, scoped, tag = 'scoped memory for tpu_custom_call.1']
    #allocation7 [shape = 'u8[4096]{0}', space=vmem, size = 0x1000, scoped, tag = 'output window, operand 0, single buffered']
    %7 = vsyncpa [#allocation3], 0
    %8 = vsyncpa [#allocation6], 0
    %9 = vsyncpa [#allocation4], 0
    // Predicated region
    $region2: #{tpu_custom_call.1} parent=1 // pred_check
      _
    $region3: #{tpu_custom_call.1} parent=1 // pred_check_branch
      %11 = sbr.rel (0) target = $region5
    $region4: #{tpu_custom_call.1} parent=1 // pred_region
      %13 = vsyncadd [#allocation3], 0
      %s15 = sshll.u32 %s0, 4
      %s16 = int_to_ptr.hbm [resolvable:$true] %s15
      %s17 = sshll.u32 [#allocation2], 4
      %s18 = int_to_ptr.vmem [resolvable:$true] %s17
      %20 = dma.hbm_to_vmem [thread:$0]  %s16, 128, %s18, [#allocation3]
    $region5: #{tpu_custom_call.1} parent=1 // pred_fallthru
      _
    // Predicated region
    $region6: #{tpu_custom_call.1} parent=1 // pred_check
      _
    $region7: #{tpu_custom_call.1} parent=1 // pred_check_branch
      %22 = sbr.rel (0) target = $region9
    $region8: #{tpu_custom_call.1} parent=1 // pred_region
      %24 = vsyncadd [#allocation6], 0
      %s26 = sshll.u32 %s1, 4
      %s27 = int_to_ptr.hbm [resolvable:$true] %s26
      %s28 = sshll.u32 [#allocation5], 4
      %s29 = int_to_ptr.vmem [resolvable:$true] %s28
      %31 = dma.hbm_to_vmem [thread:$0]  %s27, 64, %s29, [#allocation6]
    $region9: #{tpu_custom_call.1} parent=1 // pred_fallthru
      _
    // Predicated region
    $region10: #{tpu_custom_call.1} parent=1 // pred_check
      _
    $region11: #{tpu_custom_call.1} parent=1 // pred_check_branch
      %33 = sbr.rel (0) target = $region13
    $region12: #{tpu_custom_call.1} parent=1 // pred_region
      %35 = dma.done [#allocation3], 128
    $region13: #{tpu_custom_call.1} parent=1 // pred_fallthru
      _
    // Predicated region
    $region14: #{tpu_custom_call.1} parent=1 // pred_check
      _
    $region15: #{tpu_custom_call.1} parent=1 // pred_check_branch
      %37 = sbr.rel (0) target = $region17
    $region16: #{tpu_custom_call.1} parent=1 // pred_region
      %39 = dma.done [#allocation6], 64
    $region17: #{tpu_custom_call.1} parent=1 // pred_fallthru
      _
    %v40 = vld [vmem:[#allocation2] sm:$0xff]
    %v41 = vld [vmem:[#allocation5] sm:$0xf]
    %v43 = vperm.slane %v41, 0
    %v44 = vperm.slane %v41, 1
    %v45 = vperm.slane %v41, 2
    %v46 = vperm.slane %v41, 3
    %v47 = vrot.slane %v44, 6
    %v48 = vrot.slane %v45, 4
    %v49 = vrot.slane %v46, 2
    %vm50 = vcmask 1041408
    %v51 = vsel %vm50, %v43, %v47
    %vm52 = vcmask 1045508
    %v53 = vsel %vm52, %v48, %v49
    %vm54 = vcmask 1043456
    %v55 = vsel %vm54, %v51, %v53
    %v57 = vadd.f32 %v40, %v55
    %58 = vst [vmem:[#allocation7] sm:$0xff] %v57
    // Predicated region
    $region18: #{tpu_custom_call.1} parent=1 // pred_check
      _
    $region19: #{tpu_custom_call.1} parent=1 // pred_check_branch
      %60 = sbr.rel (0) target = $region21
    $region20: #{tpu_custom_call.1} parent=1 // pred_region
      %62 = vsyncadd [#allocation4], 0
      %s64 = sshll.u32 [#allocation7], 4
      %s65 = int_to_ptr.vmem [resolvable:$true] %s64
      %s66 = sshll.u32 %s2, 4
      %s67 = int_to_ptr.hbm [resolvable:$true] %s66
      %69 = dma.vmem_to_hbm [thread:$0]  %s65, 128, %s67, [#allocation4]
    $region21: #{tpu_custom_call.1} parent=1 // pred_fallthru
      _
    // Predicated region
    $region22: #{tpu_custom_call.1} parent=1 // pred_check
      _
    $region23: #{tpu_custom_call.1} parent=1 // pred_check_branch
      %71 = sbr.rel (0) target = $region25
    $region24: #{tpu_custom_call.1} parent=1 // pred_region
      %73 = dma.done [#allocation4], 128
    $region25: #{tpu_custom_call.1} parent=1 // pred_fallthru
      _
    %74 = vsyncpa [#allocation3], 1
    %75 = vsyncpa [#allocation6], 1
    %76 = vsyncpa [#allocation4], 1

</llo_original>
